<compile_context>
chip_gen: v7x
topology: tpu7x:2x2x1
jax: 0.10.0
libtpu: 0.0.40
codegen_flags: <defaults>
</compile_context>

<pallas_src>
import math
import functools

import jax
import jax.numpy as jnp
from jax.experimental import pallas as pl
from jax.experimental.pallas import tpu as pltpu


# ----------------------------------------------------------------------------
# Kernels
# ----------------------------------------------------------------------------
def _pe_add_kernel(x_ref, pe_ref, o_ref):
    """out[r, c] = x[r, c] + pe[0, c]   (eval mode: dropout is identity)."""
    # x_ref block: (TB, TC); pe_ref block: (1, TC) -> cheap sublane broadcast.
    y = x_ref[...].astype(jnp.float32) + pe_ref[...]
    o_ref[...] = y.astype(o_ref.dtype)


def _pe_add_dropout_kernel(x_ref, pe_ref, u_ref, o_ref, *, p: float):
    """out = dropout(x + pe, p) with inverted scaling; mask = (u >= p)."""
    y = x_ref[...].astype(jnp.float32) + pe_ref[...]
    keep = u_ref[...] >= jnp.float32(p)
    scale = jnp.float32(1.0 / (1.0 - p))
    o_ref[...] = jnp.where(keep, y * scale, jnp.zeros_like(y)).astype(o_ref.dtype)


# ----------------------------------------------------------------------------
# Parameter setup (same math as the PyTorch __init__)
# ----------------------------------------------------------------------------
def make_positional_encoding_table(d_model: int, max_len: int = 50) -> jnp.ndarray:
    position = jnp.arange(max_len, dtype=jnp.float32)[:, None]              # [max_len, 1]
    div_term = jnp.exp(
        jnp.arange(0, d_model, 2, dtype=jnp.float32) * (-math.log(10000.0) / d_model)
    )                                                                        # [d_model/2]
    angles = position * div_term                                             # [max_len, d_model/2]
    pe = jnp.zeros((max_len, d_model), dtype=jnp.float32)
    pe = pe.at[:, 0::2].set(jnp.sin(angles))
    pe = pe.at[:, 1::2].set(jnp.cos(angles))
    return pe


# ----------------------------------------------------------------------------
# Tiling: lane-dense, ~1 MiB blocks (safe under v5e's 16 MiB scoped VMEM once
# double-buffered, and trivially under v7x's 64 MiB physical VMEM).
# ----------------------------------------------------------------------------
def _choose_tiles(batch: int, row: int, itemsize: int, target_bytes: int = 1 << 20):
    # Column tile: full row if it fits (always legal), else a multiple of 128.
    if row * itemsize <= target_bytes or row <= 128:
        tc = row
    else:
        tc = max(128, min(row, ((target_bytes // (8 * itemsize)) // 128) * 128))
    # Row tile: multiple of 8, or the full batch extent.
    tb = max(1, target_bytes // (tc * itemsize))
    if tb >= batch or batch < 8:
        tb = batch
    else:
        tb = max(8, (tb // 8) * 8)
    return tb, tc


# ----------------------------------------------------------------------------
# Module-equivalent forward
# ----------------------------------------------------------------------------
def positional_encoding_forward(
    x: jnp.ndarray,
    pe: jnp.ndarray,
    *,
    dropout_p: float = 0.1,
    training: bool = False,
    rng_key=None,
) -> jnp.ndarray:
    """Forward pass of PositionalEncoding.

    Args:
      x:  [B, S, D] float array.
      pe: [max_len, D] positional-encoding table (S <= max_len), float32.
      rng_key: per-call PRNG key for dropout (pass a fresh key per call/layer).
    """
    B, S, D = x.shape
    row = S * D

    # Lane-dense flattening: last dim becomes S*D (full-extent or 128-multiple
    # tiles -> unmasked full-lane stores even when d_model < 128).
    x_flat = x.reshape(B, row)
    pe_flat = pe[:S, :].astype(jnp.float32).reshape(1, row)  # keep f32 for parity

    itemsize = jnp.dtype(x.dtype).itemsize
    tb, tc = _choose_tiles(B, row, itemsize)
    grid = (pl.cdiv(B, tb), pl.cdiv(row, tc))

    x_spec = pl.BlockSpec((tb, tc), lambda i, j: (i, j))
    pe_spec = pl.BlockSpec((1, tc), lambda i, j: (0, j))
    out_spec = pl.BlockSpec((tb, tc), lambda i, j: (i, j))
    out_shape = jax.ShapeDtypeStruct((B, row), x.dtype)

    compiler_params = pltpu.CompilerParams(
        # Both axes are order-independent; lets megacore (v7x) split the grid.
        dimension_semantics=("parallel", "parallel"),
        # >= scoped default on every generation; blocks here are ~1 MiB so the
        # double-buffered pipeline stays far below this on v5e/v6e/v7x.
        vmem_limit_bytes=32 * 1024 * 1024,
    )

    if training and dropout_p > 0.0:
        if rng_key is None:
            rng_key = jax.random.PRNGKey(0)
        u = jax.random.uniform(rng_key, (B, row), dtype=jnp.float32)
        kernel = functools.partial(_pe_add_dropout_kernel, p=float(dropout_p))
        u_spec = pl.BlockSpec((tb, tc), lambda i, j: (i, j))
        out_flat = pl.pallas_call(
            kernel,
            grid_spec=pltpu.PrefetchScalarGridSpec(
                num_scalar_prefetch=0,
                grid=grid,
                in_specs=[x_spec, pe_spec, u_spec],
                out_specs=out_spec,
            ),
            out_shape=out_shape,
            compiler_params=compiler_params,
        )(x_flat, pe_flat, u)
    else:
        # Eval mode: Dropout is identity.
        out_flat = pl.pallas_call(
            _pe_add_kernel,
            grid_spec=pltpu.PrefetchScalarGridSpec(
                num_scalar_prefetch=0,
                grid=grid,
                in_specs=[x_spec, pe_spec],
                out_specs=out_spec,
            ),
            out_shape=out_shape,
            compiler_params=compiler_params,
        )(x_flat, pe_flat)

    return out_flat.reshape(B, S, D)


# ----------------------------------------------------------------------------
# Demo / self-test
# ----------------------------------------------------------------------------
if __name__ == "__main__":
    d_model = 32
    max_len = 50
    batch, seq_len = 2, 8
    p = 0.1

    key = jax.random.PRNGKey(0)
    x = jax.random.normal(key, (batch, seq_len, d_model), dtype=jnp.float32)

    pe = make_positional_encoding_table(d_model, max_len)
    ref = x + pe[:seq_len, :][None, :, :]

    # Eval-mode forward (dropout == identity): numerically checkable.
    out = positional_encoding_forward(x, pe, dropout_p=p, training=False)
    out = jax.block_until_ready(out)
    assert out.shape == x.shape and out.dtype == x.dtype
    assert jnp.allclose(out, ref, atol=1e-6, rtol=1e-6)

    # Training-mode forward: mask comes from the wrapper-side uniform draw, so
    # the reference is exactly reconstructable.
    key_drop = jax.random.PRNGKey(42)
    out_tr = positional_encoding_forward(
        x, pe, dropout_p=p, training=True, rng_key=key_drop
    )
    out_tr = jax.block_until_ready(out_tr)
    assert out_tr.shape == x.shape

    u = jax.random.uniform(
        key_drop, (batch, seq_len * d_model), dtype=jnp.float32
    ).reshape(batch, seq_len, d_model)
    ref_tr = jnp.where(u >= jnp.float32(p), ref * jnp.float32(1.0 / (1.0 - p)), 0.0)
    assert jnp.allclose(out_tr, ref_tr, atol=1e-6, rtol=1e-6)

    print("KERNEL_OK")
</pallas_src>

<mosaic_0001>
module attributes {stable_mosaic.version = 11 : i64} {
  func.func @_pe_add_kernel(%arg0: i32, %arg1: i32, %arg2: memref<2x256xf32, #tpu.memory_space<vmem>>, %arg3: memref<1x256xf32, #tpu.memory_space<vmem>>, %arg4: memref<2x256xf32, #tpu.memory_space<vmem>>) attributes {dimension_semantics = [#tpu.dimension_semantics<parallel>, #tpu.dimension_semantics<parallel>], iteration_bounds = array<i64: 1, 1>, scalar_prefetch = 0 : i64, scratch_operands = 0 : i64, tpu.core_type = #tpu.core_type<tc>, window_params = [{transform_indices = @transform_0, window_bounds = array<i64: 2, 256>}, {transform_indices = @transform_1, window_bounds = array<i64: 1, 256>}, {transform_indices = @transform_2, window_bounds = array<i64: 2, 256>}]} {
    %c0 = arith.constant 0 : index
    %c0_0 = arith.constant 0 : index
    %0 = vector.load %arg2[%c0, %c0_0] : memref<2x256xf32, #tpu.memory_space<vmem>>, vector<2x256xf32>
    %c0_1 = arith.constant 0 : index
    %c0_2 = arith.constant 0 : index
    %1 = vector.load %arg3[%c0_1, %c0_2] : memref<1x256xf32, #tpu.memory_space<vmem>>, vector<1x256xf32>
    %2 = vector.broadcast %1 : vector<1x256xf32> to vector<2x256xf32>
    %3 = arith.addf %0, %2 : vector<2x256xf32>
    %c0_3 = arith.constant 0 : index
    %c0_4 = arith.constant 0 : index
    %4 = vector.load %arg4[%c0_3, %c0_4] : memref<2x256xf32, #tpu.memory_space<vmem>>, vector<2x256xf32>
    tpu.vector_store %arg4[%c0_3, %c0_4], %3 {strides = array<i32>} : memref<2x256xf32, #tpu.memory_space<vmem>>, vector<2x256xf32>,
    return
  }
  func.func @transform_0(%arg0: i32, %arg1: i32) -> (i32, i32) {
    %c0_i32 = arith.constant 0 : i32
    return %arg0, %arg1 : i32, i32
  }
  func.func @transform_1(%arg0: i32, %arg1: i32) -> (i32, i32) {
    %c0_i32 = arith.constant 0 : i32
    %c0_i32_0 = arith.constant 0 : i32
    return %c0_i32, %arg1 : i32, i32
  }
  func.func @transform_2(%arg0: i32, %arg1: i32) -> (i32, i32) {
    %c0_i32 = arith.constant 0 : i32
    return %arg0, %arg1 : i32, i32
  }
}

</mosaic_0001>

<llo_original>
// kernel: tpu_custom_call.1
$region0: #{tpu_custom_call.1}
  #allocation0 [shape = 'u32[]', space=smem, size = 0x4, offset = 0x4, fixed_abs, tag = 'smem constant byte address 0x4 - core index']
  #allocation1 [shape = 'u32[144,128]{1,0:T(1,128)}', space=vmem, size = 0x12000, scoped, tag = 'internal scratch']
  %s0 = inlined_call_operand.hbm [shape: f32[2,256], index: 0, kind: input, shape index: {}]
  %s1 = inlined_call_operand.vmem [shape: f32[1,256], index: 1, kind: input, shape index: {}]
  %s2 = inlined_call_operand.hbm [shape: f32[2,256], index: 2, kind: output, shape index: {}]
  %s3 = sld [smem:[#allocation0]]
  $region22: #{tpu_custom_call.1} parent=0
    _
  %s5 = ssub.s32 1, %s3
  %s6 = scalar_select 0, %s5, %s3
  $region1: #{tpu_custom_call.1} parent=0
    #allocation2 [shape = 'u8[2048]{0}', space=vmem, size = 0x800, scoped, tag = 'input window, operand 0, single buffered']
    #allocation3 [shape = 's32[1]{0}', space=sflag, size = 0x4, scoped, tag = 'scoped memory for tpu_custom_call.1']
    #allocation4 [shape = 's32[1]{0}', space=sflag, size = 0x4, scoped, tag = 'scoped memory for tpu_custom_call.1']
    #allocation5 [shape = 'u8[2048]{0}', space=vmem, size = 0x800, scoped, tag = 'output window, operand 0, single buffered']
    %7 = vsyncpa [#allocation3], 0
    %8 = vsyncpa [#allocation4], 0
    // Predicated region
    $region2: #{tpu_custom_call.1} parent=1 // pred_check
      _
    $region3: #{tpu_custom_call.1} parent=1 // pred_check_branch
      %10 = sbr.rel (0) target = $region5
    $region4: #{tpu_custom_call.1} parent=1 // pred_region
      %s12 = ssub.s32 64, 64
      %13 = vsyncadd [#allocation3], %s12
      %s15 = sshll.u32 [#allocation2], 4
      %s16 = int_to_ptr.vmem [resolvable:$true] %s15
      %18 = dma.hbm_to_vmem [thread:$0]  %s0, 64, %s16, [#allocation3]
    $region5: #{tpu_custom_call.1} parent=1 // pred_fallthru
      _
    // Predicated region
    $region6: #{tpu_custom_call.1} parent=1 // pred_check
      _
    $region7: #{tpu_custom_call.1} parent=1 // pred_check_branch
      %20 = sbr.rel (0) target = $region9
    $region8: #{tpu_custom_call.1} parent=1 // pred_region
      _
    $region9: #{tpu_custom_call.1} parent=1 // pred_fallthru
      _
    // Predicated region
    $region10: #{tpu_custom_call.1} parent=1 // pred_check
      _
    $region11: #{tpu_custom_call.1} parent=1 // pred_check_branch
      %22 = sbr.rel (0) target = $region13
    $region12: #{tpu_custom_call.1} parent=1 // pred_region
      %23 = dma.done [#allocation3], 64
    $region13: #{tpu_custom_call.1} parent=1 // pred_fallthru
      _
    %v24 = vld [vmem:[#allocation2] sm:$0xf]
    %v25 = vld [vmem:[%s1] sm:$0x3]
    %v27 = vlaneseq
    %v28 = vshrl.u32 %v27, 7
    %v29 = vsub.s32 0, %v28
    %v30 = vrot.slane %v25, %v29
    %v31 = vlaneseq
    %v32 = vshrl.u32 %v31, 7
    %v33 = vsub.s32 1, %v32
    %v34 = vrot.slane %v25, %v33
    %v35 = vcombine.low %v30, %v34
    %v37 = vunpack.c.l.s4 1983009808
    %v38 = vunpack.c.0.s8 %v37
    %v39 = vlaneseq
    %v40 = vshrl.u32 %v39, 7
    %v41 = vsub.s32 %v38, %v40
    %v42 = vrot.slane %v35, %v41
    %v44 = vadd.f32 %v24, %v42
    %45 = vst [vmem:[#allocation5] sm:$0xf] %v44
    // Predicated region
    $region14: #{tpu_custom_call.1} parent=1 // pred_check
      _
    $region15: #{tpu_custom_call.1} parent=1 // pred_check_branch
      %47 = sbr.rel (0) target = $region17
    $region16: #{tpu_custom_call.1} parent=1 // pred_region
      %s49 = ssub.s32 64, 64
      %50 = vsyncadd [#allocation4], %s49
      %s52 = sshll.u32 [#allocation5], 4
      %s53 = int_to_ptr.vmem [resolvable:$true] %s52
      %55 = dma.vmem_to_hbm [thread:$0]  %s53, 64, %s2, [#allocation4]
    $region17: #{tpu_custom_call.1} parent=1 // pred_fallthru
      _
    // Predicated region
    $region18: #{tpu_custom_call.1} parent=1 // pred_check
      _
    $region19: #{tpu_custom_call.1} parent=1 // pred_check_branch
      %57 = sbr.rel (0) target = $region21
    $region20: #{tpu_custom_call.1} parent=1 // pred_region
      %58 = dma.done [#allocation4], 64
    $region21: #{tpu_custom_call.1} parent=1 // pred_fallthru
      _
    %59 = vsyncpa [#allocation3], 1
    %60 = vsyncpa [#allocation4], 1

</llo_original>
